<compile_context>
chip_gen: v5e
topology: v5e:2x2
jax: 0.10.0
libtpu: 0.0.40
codegen_flags: <defaults>
</compile_context>

<pallas_src>
import functools

import jax
import jax.numpy as jnp
from jax.experimental import pallas as pl
from jax.experimental.pallas import tpu as pltpu


D_REWARD_COEFF = 0.4
CL_REWARD_COEFF = 0.2


# ----------------------------------------------------------------------------
# Fused Pallas kernel: whole Env.forward in one call
# ----------------------------------------------------------------------------
def _env_fused_kernel(z_ref,
                      dec_w1, dec_b1, dec_wh, dec_bh,
                      gen_w1, gen_b1, gen_w2, gen_b2,
                      dis_w1, dis_b1, dis_w2, dis_b2,
                      cls_we, cls_be, cls_wc, cls_bc,
                      packed_ref, reward_ref,
                      *, n_discrete, n_cont, n_binary, cl_coeff, d_coeff):
    f32 = jnp.float32
    total = n_discrete + n_cont + n_binary

    z = z_ref[...]

    # --- decoder trunk + merged (lane-padded) heads ---------------------------
    h = jnp.tanh(jnp.dot(z, dec_w1[...], preferred_element_type=f32) + dec_b1[...])
    heads = jnp.dot(h, dec_wh[...], preferred_element_type=f32) + dec_bh[...]
    B, PW = heads.shape

    col = jax.lax.broadcasted_iota(jnp.int32, (B, PW), 1)
    is_d = col < n_discrete
    is_c = jnp.logical_and(col >= n_discrete, col < n_discrete + n_cont)
    is_b = jnp.logical_and(col >= n_discrete + n_cont, col < total)

    # masked softmax over the discrete columns only
    d_masked = jnp.where(is_d, heads, -1e30)
    m_d = jnp.max(d_masked, axis=-1, keepdims=True)
    e_d = jnp.where(is_d, jnp.exp(heads - m_d), 0.0)
    s_d = jnp.sum(e_d, axis=-1, keepdims=True)
    d_soft = e_d * pl.reciprocal(s_d, approx=True)

    b_sig = jax.nn.sigmoid(heads)

    # decoded lives in lanes [0, total); padded lanes are exactly 0
    decoded = jnp.where(is_d, d_soft,
                        jnp.where(is_c, heads,
                                  jnp.where(is_b, b_sig, 0.0)))

    # --- generator + discriminator (gen_w1 is zero-row-padded to PW) ----------
    g_h = jnp.maximum(
        jnp.dot(decoded, gen_w1[...], preferred_element_type=f32) + gen_b1[...], 0.0)
    gen_out = jnp.tanh(
        jnp.dot(g_h, gen_w2[...], preferred_element_type=f32) + gen_b2[...])
    d_h = jnp.maximum(
        jnp.dot(gen_out, dis_w1[...], preferred_element_type=f32) + dis_b1[...], 0.0)
    dis_judge = jax.nn.sigmoid(
        jnp.dot(d_h, dis_w2[...], preferred_element_type=f32) + dis_b2[...])  # [B,1]

    # --- per-feature min/max normalization over the batch ----------------------
    mn = jnp.min(decoded, axis=0, keepdims=True)
    mx = jnp.max(decoded, axis=0, keepdims=True)
    dec_norm = (decoded - mn) * pl.reciprocal(mx - mn + 1e-7, approx=True)

    # --- classifier encoder + classify (cls_we zero-row-padded to PW) ---------
    enc = jnp.maximum(
        jnp.dot(dec_norm, cls_we[...], preferred_element_type=f32) + cls_be[...], 0.0)
    logits = jnp.dot(enc, cls_wc[...], preferred_element_type=f32) + cls_bc[...]

    lm = jnp.max(logits, axis=-1, keepdims=True)
    le = jnp.exp(logits - lm)
    ls = jnp.sum(le, axis=-1, keepdims=True)
    preds = le * pl.reciprocal(ls, approx=True)
    max_probs = jnp.max(preds, axis=-1, keepdims=True)          # [B, 1]

    # --- reward = cl * CE(logits, argmax(logits)) + d * BCE(dis_judge, ones) ---
    # CE with pseudo labels = argmax: logits[argmax] == max, so
    #   CE = mean(log(sum(exp(logits - max)))).
    ce = jnp.mean(jnp.log(ls))
    # BCE(p, 1) = mean(-log(p)); torch clamps log at -100.
    bce = jnp.mean(-jnp.maximum(jnp.log(dis_judge), -100.0))
    reward_ref[0, 0] = cl_coeff * ce + d_coeff * bce

    # --- single lane-dense packed output: [decoded | max_probs | zeros] -------
    packed_ref[...] = decoded + jnp.where(col == total, max_probs, 0.0)


# ----------------------------------------------------------------------------
# Synthetic sub-model parameters (deterministic), pre-merged / pre-padded
# ----------------------------------------------------------------------------
def _dense_init(key, n_in, n_out, scale=0.2):
    kw, kb = jax.random.split(key)
    w = jax.random.normal(kw, (n_in, n_out), jnp.float32) * scale
    b = jax.random.normal(kb, (1, n_out), jnp.float32) * scale   # (1, N) bias
    return w, b


def make_params(key, z_dim, dec_hidden, n_discrete, n_cont, n_binary,
                gen_hidden, gen_out_dim, dis_hidden, enc_hidden, n_classes,
                pack_w):
    keys = jax.random.split(key, 10)
    decoded_dim = n_discrete + n_cont + n_binary
    lane_pad = pack_w - decoded_dim
    p = {}
    p["dec_w1"], p["dec_b1"] = _dense_init(keys[0], z_dim, dec_hidden)

    # merged decoder heads (softmax | identity | sigmoid), zero-padded to pack_w
    wd, bd = _dense_init(keys[1], dec_hidden, n_discrete)
    wc, bc = _dense_init(keys[2], dec_hidden, n_cont)
    wb, bb = _dense_init(keys[3], dec_hidden, n_binary)
    p["dec_wh"] = jnp.pad(jnp.concatenate([wd, wc, wb], axis=1),
                          ((0, 0), (0, lane_pad)))
    p["dec_bh"] = jnp.pad(jnp.concatenate([bd, bc, bb], axis=1),
                          ((0, 0), (0, lane_pad)))

    # consumers of `decoded`: zero-row-pad so padded lanes contribute nothing
    w, b = _dense_init(keys[4], decoded_dim, gen_hidden)
    p["gen_w1"] = jnp.pad(w, ((0, lane_pad), (0, 0)))
    p["gen_b1"] = b
    p["gen_w2"], p["gen_b2"] = _dense_init(keys[5], gen_hidden, gen_out_dim)
    p["dis_w1"], p["dis_b1"] = _dense_init(keys[6], gen_out_dim, dis_hidden)
    p["dis_w2"], p["dis_b2"] = _dense_init(keys[7], dis_hidden, 1)
    w, b = _dense_init(keys[8], decoded_dim, enc_hidden)
    p["cls_we"] = jnp.pad(w, ((0, lane_pad), (0, 0)))
    p["cls_be"] = b
    p["cls_wc"], p["cls_bc"] = _dense_init(keys[9], enc_hidden, n_classes)
    return p


_PARAM_ORDER = ("dec_w1", "dec_b1", "dec_wh", "dec_bh",
                "gen_w1", "gen_b1", "gen_w2", "gen_b2",
                "dis_w1", "dis_b1", "dis_w2", "dis_b2",
                "cls_we", "cls_be", "cls_wc", "cls_bc")


# ----------------------------------------------------------------------------
# Env.forward equivalent (jitted wrapper around ONE fused pallas_call)
# ----------------------------------------------------------------------------
def build_env_forward(n_discrete, n_cont, n_binary, n_classes, pack_w):
    decoded_dim = n_discrete + n_cont + n_binary
    kernel = functools.partial(
        _env_fused_kernel,
        n_discrete=n_discrete, n_cont=n_cont, n_binary=n_binary,
        cl_coeff=CL_REWARD_COEFF, d_coeff=D_REWARD_COEFF)

    @jax.jit
    def _forward(params, action, disc_values, episode_target):
        B = action.shape[0]
        # one_hot(episode_target, 4); z = concat([z_cont, z_disc, labels])
        labels = jax.nn.one_hot(episode_target.astype(jnp.int32), n_classes,
                                dtype=jnp.float32)
        z_disc = jnp.broadcast_to(disc_values[None, :].astype(jnp.float32),
                                  (B, disc_values.shape[0]))
        z = jnp.concatenate([action.astype(jnp.float32), z_disc, labels], axis=1)

        packed, reward = pl.pallas_call(
            kernel,
            out_shape=(jax.ShapeDtypeStruct((B, pack_w), jnp.float32),
                       jax.ShapeDtypeStruct((1, 1), jnp.float32)),
            in_specs=[pl.BlockSpec(memory_space=pltpu.MemorySpace.VMEM)]
                      * (1 + len(_PARAM_ORDER)),
            out_specs=(pl.BlockSpec(memory_space=pltpu.MemorySpace.VMEM),
                       pl.BlockSpec(memory_space=pltpu.MemorySpace.SMEM)),
        )(z, *[params[k] for k in _PARAM_ORDER])

        next_state = packed[:, :decoded_dim]     # decoded ("all_samples")
        max_probs = packed[:, decoded_dim]       # per-sample max softmax prob
        return next_state, reward[0, 0], max_probs

    def env_forward(params, action, disc_values, episode_target):
        next_state, reward, max_probs = _forward(params, action, disc_values,
                                                 episode_target)
        done = True
        return next_state, reward, done, max_probs

    return env_forward


# ----------------------------------------------------------------------------
if __name__ == "__main__":
    key = jax.random.PRNGKey(0)
    k_par, k_act, k_tgt = jax.random.split(key, 3)

    # shapes
    B = 8              # batch / episode length
    N_CONT = 8         # continuous latent (action) dim
    N_DISC = 4         # discrete latent dim (len(disc))
    N_CLASSES = 4      # one_hot num_classes
    Z_DIM = N_CONT + N_DISC + N_CLASSES

    N_DISCRETE_FEAT, N_CONT_FEAT, N_BIN_FEAT = 3, 2, 1
    DECODED_DIM = N_DISCRETE_FEAT + N_CONT_FEAT + N_BIN_FEAT
    PACK_W = 128       # lane-dense packed output width (>= decoded_dim + 1)

    params = make_params(
        k_par, z_dim=Z_DIM, dec_hidden=32,
        n_discrete=N_DISCRETE_FEAT, n_cont=N_CONT_FEAT, n_binary=N_BIN_FEAT,
        gen_hidden=32, gen_out_dim=16, dis_hidden=16,
        enc_hidden=8, n_classes=N_CLASSES, pack_w=PACK_W,
    )

    action = jax.random.normal(k_act, (B, N_CONT), jnp.float32)
    disc = {"d0": 0.3, "d1": -0.1, "d2": 0.7, "d3": 0.05}   # disc.values()
    disc_values = jnp.array(list(disc.values()), dtype=jnp.float32)
    episode_target = jax.random.randint(k_tgt, (B,), 0, N_CLASSES)

    env_forward = build_env_forward(
        n_discrete=N_DISCRETE_FEAT, n_cont=N_CONT_FEAT, n_binary=N_BIN_FEAT,
        n_classes=N_CLASSES, pack_w=PACK_W)

    next_state, reward, done, max_probs = env_forward(
        params, action, disc_values, episode_target)
    jax.block_until_ready((next_state, reward, max_probs))

    assert next_state.shape == (B, DECODED_DIM)
    assert max_probs.shape == (B,)
    assert bool(jnp.isfinite(reward))

    print("KERNEL_OK")
</pallas_src>

<mosaic_0001>
module attributes {stable_mosaic.version = 11 : i64} {
  func.func @_env_fused_kernel(%arg0: memref<8x16xf32, #tpu.memory_space<vmem>>, %arg1: memref<16x32xf32, #tpu.memory_space<vmem>>, %arg2: memref<1x32xf32, #tpu.memory_space<vmem>>, %arg3: memref<32x128xf32, #tpu.memory_space<vmem>>, %arg4: memref<1x128xf32, #tpu.memory_space<vmem>>, %arg5: memref<128x32xf32, #tpu.memory_space<vmem>>, %arg6: memref<1x32xf32, #tpu.memory_space<vmem>>, %arg7: memref<32x16xf32, #tpu.memory_space<vmem>>, %arg8: memref<1x16xf32, #tpu.memory_space<vmem>>, %arg9: memref<16x16xf32, #tpu.memory_space<vmem>>, %arg10: memref<1x16xf32, #tpu.memory_space<vmem>>, %arg11: memref<16x1xf32, #tpu.memory_space<vmem>>, %arg12: memref<1x1xf32, #tpu.memory_space<vmem>>, %arg13: memref<128x8xf32, #tpu.memory_space<vmem>>, %arg14: memref<1x8xf32, #tpu.memory_space<vmem>>, %arg15: memref<8x4xf32, #tpu.memory_space<vmem>>, %arg16: memref<1x4xf32, #tpu.memory_space<vmem>>, %arg17: memref<8x128xf32, #tpu.memory_space<vmem>>, %arg18: memref<1x1xf32, #tpu.memory_space<smem>>) attributes {dimension_semantics = [], scalar_prefetch = 0 : i64, scratch_operands = 0 : i64, tpu.core_type = #tpu.core_type<tc>} {
    %c0 = arith.constant 0 : index
    %c0_0 = arith.constant 0 : index
    %0 = vector.load %arg0[%c0, %c0_0] : memref<8x16xf32, #tpu.memory_space<vmem>>, vector<8x16xf32>
    %c0_1 = arith.constant 0 : index
    %c0_2 = arith.constant 0 : index
    %1 = vector.load %arg1[%c0_1, %c0_2] : memref<16x32xf32, #tpu.memory_space<vmem>>, vector<16x32xf32>
    %cst = arith.constant dense<0.000000e+00> : vector<8x32xf32>
    %2 = tpu.matmul %0, %1, %cst {dimension_numbers = #tpu.dot_dimension_numbers<[1], [0], [0], [1], [0, 0, 1, 1], [], []>} : vector<8x16xf32>, vector<16x32xf32>, vector<8x32xf32> -> vector<8x32xf32>
    %c0_3 = arith.constant 0 : index
    %c0_4 = arith.constant 0 : index
    %3 = vector.load %arg2[%c0_3, %c0_4] : memref<1x32xf32, #tpu.memory_space<vmem>>, vector<1x32xf32>
    %4 = vector.broadcast %3 : vector<1x32xf32> to vector<8x32xf32>
    %5 = arith.addf %2, %4 : vector<8x32xf32>
    %6 = math.tanh %5 : vector<8x32xf32>
    %c0_5 = arith.constant 0 : index
    %c0_6 = arith.constant 0 : index
    %7 = vector.load %arg3[%c0_5, %c0_6] : memref<32x128xf32, #tpu.memory_space<vmem>>, vector<32x128xf32>
    %cst_7 = arith.constant dense<0.000000e+00> : vector<8x128xf32>
    %8 = tpu.matmul %6, %7, %cst_7 {dimension_numbers = #tpu.dot_dimension_numbers<[1], [0], [0], [1], [0, 0, 1, 1], [], []>} : vector<8x32xf32>, vector<32x128xf32>, vector<8x128xf32> -> vector<8x128xf32>
    %c0_8 = arith.constant 0 : index
    %c0_9 = arith.constant 0 : index
    %9 = vector.load %arg4[%c0_8, %c0_9] : memref<1x128xf32, #tpu.memory_space<vmem>>, vector<1x128xf32>
    %10 = vector.broadcast %9 : vector<1x128xf32> to vector<8x128xf32>
    %11 = arith.addf %8, %10 : vector<8x128xf32>
    %12 = tpu.iota {dimensions = array<i32: 1>} : vector<8x128xi32>
    %c3_i32 = arith.constant 3 : i32
    %13 = vector.broadcast %c3_i32 : i32 to vector<8x128xi32>
    %14 = arith.cmpi slt, %12, %13 : vector<8x128xi32>
    %c3_i32_10 = arith.constant 3 : i32
    %15 = vector.broadcast %c3_i32_10 : i32 to vector<8x128xi32>
    %16 = arith.cmpi sge, %12, %15 : vector<8x128xi32>
    %c5_i32 = arith.constant 5 : i32
    %17 = vector.broadcast %c5_i32 : i32 to vector<8x128xi32>
    %18 = arith.cmpi slt, %12, %17 : vector<8x128xi32>
    %19 = arith.andi %16, %18 : vector<8x128xi1>
    %c5_i32_11 = arith.constant 5 : i32
    %20 = vector.broadcast %c5_i32_11 : i32 to vector<8x128xi32>
    %21 = arith.cmpi sge, %12, %20 : vector<8x128xi32>
    %c6_i32 = arith.constant 6 : i32
    %22 = vector.broadcast %c6_i32 : i32 to vector<8x128xi32>
    %23 = arith.cmpi slt, %12, %22 : vector<8x128xi32>
    %24 = arith.andi %21, %23 : vector<8x128xi1>
    %cst_12 = arith.constant -1.000000e+30 : f32
    %25 = vector.broadcast %cst_12 : f32 to vector<8x128xf32>
    %26 = arith.select %14, %11, %25 : vector<8x128xi1>, vector<8x128xf32>
    %cst_13 = arith.constant dense<0xFF800000> : vector<8xf32>
    %27 = vector.multi_reduction <maximumf>, %26, %cst_13 [1] : vector<8x128xf32> to vector<8xf32>
    %28 = vector.shape_cast %27 : vector<8xf32> to vector<8x1xf32>
    %29 = vector.broadcast %28 : vector<8x1xf32> to vector<8x128xf32>
    %30 = arith.subf %11, %29 : vector<8x128xf32>
    %31 = math.exp %30 : vector<8x128xf32>
    %cst_14 = arith.constant 0.000000e+00 : f32
    %32 = vector.broadcast %cst_14 : f32 to vector<8x128xf32>
    %33 = arith.select %14, %31, %32 : vector<8x128xi1>, vector<8x128xf32>
    %cst_15 = arith.constant dense<0.000000e+00> : vector<8xf32>
    %34 = vector.multi_reduction <add>, %33, %cst_15 [1] : vector<8x128xf32> to vector<8xf32>
    %35 = vector.shape_cast %34 : vector<8xf32> to vector<8x1xf32>
    %36 = tpu.reciprocal %35 {approx = true} : vector<8x1xf32> -> vector<8x1xf32>
    %37 = vector.broadcast %36 : vector<8x1xf32> to vector<8x128xf32>
    %38 = arith.mulf %33, %37 : vector<8x128xf32>
    %39 = arith.negf %11 : vector<8x128xf32>
    %40 = math.exp %39 : vector<8x128xf32>
    %cst_16 = arith.constant 1.000000e+00 : f32
    %41 = vector.broadcast %cst_16 : f32 to vector<8x128xf32>
    %42 = arith.addf %41, %40 : vector<8x128xf32>
    %43 = arith.divf %41, %42 : vector<8x128xf32>
    %cst_17 = arith.constant 0.000000e+00 : f32
    %44 = vector.broadcast %cst_17 : f32 to vector<8x128xf32>
    %45 = arith.select %24, %43, %44 : vector<8x128xi1>, vector<8x128xf32>
    %46 = arith.select %19, %11, %45 : vector<8x128xi1>, vector<8x128xf32>
    %47 = arith.select %14, %38, %46 : vector<8x128xi1>, vector<8x128xf32>
    %c0_18 = arith.constant 0 : index
    %c0_19 = arith.constant 0 : index
    %48 = vector.load %arg5[%c0_18, %c0_19] : memref<128x32xf32, #tpu.memory_space<vmem>>, vector<128x32xf32>
    %cst_20 = arith.constant dense<0.000000e+00> : vector<8x32xf32>
    %49 = tpu.matmul %47, %48, %cst_20 {dimension_numbers = #tpu.dot_dimension_numbers<[1], [0], [0], [1], [0, 0, 1, 1], [], []>} : vector<8x128xf32>, vector<128x32xf32>, vector<8x32xf32> -> vector<8x32xf32>
    %c0_21 = arith.constant 0 : index
    %c0_22 = arith.constant 0 : index
    %50 = vector.load %arg6[%c0_21, %c0_22] : memref<1x32xf32, #tpu.memory_space<vmem>>, vector<1x32xf32>
    %51 = vector.broadcast %50 : vector<1x32xf32> to vector<8x32xf32>
    %52 = arith.addf %49, %51 : vector<8x32xf32>
    %cst_23 = arith.constant 0.000000e+00 : f32
    %53 = vector.broadcast %cst_23 : f32 to vector<8x32xf32>
    %54 = arith.maximumf %52, %53 : vector<8x32xf32>
    %c0_24 = arith.constant 0 : index
    %c0_25 = arith.constant 0 : index
    %55 = vector.load %arg7[%c0_24, %c0_25] : memref<32x16xf32, #tpu.memory_space<vmem>>, vector<32x16xf32>
    %cst_26 = arith.constant dense<0.000000e+00> : vector<8x16xf32>
    %56 = tpu.matmul %54, %55, %cst_26 {dimension_numbers = #tpu.dot_dimension_numbers<[1], [0], [0], [1], [0, 0, 1, 1], [], []>} : vector<8x32xf32>, vector<32x16xf32>, vector<8x16xf32> -> vector<8x16xf32>
    %c0_27 = arith.constant 0 : index
    %c0_28 = arith.constant 0 : index
    %57 = vector.load %arg8[%c0_27, %c0_28] : memref<1x16xf32, #tpu.memory_space<vmem>>, vector<1x16xf32>
    %58 = vector.broadcast %57 : vector<1x16xf32> to vector<8x16xf32>
    %59 = arith.addf %56, %58 : vector<8x16xf32>
    %60 = math.tanh %59 : vector<8x16xf32>
    %c0_29 = arith.constant 0 : index
    %c0_30 = arith.constant 0 : index
    %61 = vector.load %arg9[%c0_29, %c0_30] : memref<16x16xf32, #tpu.memory_space<vmem>>, vector<16x16xf32>
    %cst_31 = arith.constant dense<0.000000e+00> : vector<8x16xf32>
    %62 = tpu.matmul %60, %61, %cst_31 {dimension_numbers = #tpu.dot_dimension_numbers<[1], [0], [0], [1], [0, 0, 1, 1], [], []>} : vector<8x16xf32>, vector<16x16xf32>, vector<8x16xf32> -> vector<8x16xf32>
    %c0_32 = arith.constant 0 : index
    %c0_33 = arith.constant 0 : index
    %63 = vector.load %arg10[%c0_32, %c0_33] : memref<1x16xf32, #tpu.memory_space<vmem>>, vector<1x16xf32>
    %64 = vector.broadcast %63 : vector<1x16xf32> to vector<8x16xf32>
    %65 = arith.addf %62, %64 : vector<8x16xf32>
    %cst_34 = arith.constant 0.000000e+00 : f32
    %66 = vector.broadcast %cst_34 : f32 to vector<8x16xf32>
    %67 = arith.maximumf %65, %66 : vector<8x16xf32>
    %c0_35 = arith.constant 0 : index
    %c0_36 = arith.constant 0 : index
    %68 = vector.load %arg11[%c0_35, %c0_36] : memref<16x1xf32, #tpu.memory_space<vmem>>, vector<16x1xf32>
    %cst_37 = arith.constant dense<0.000000e+00> : vector<8x1xf32>
    %69 = tpu.matmul %67, %68, %cst_37 {dimension_numbers = #tpu.dot_dimension_numbers<[1], [0], [0], [1], [0, 0, 1, 1], [], []>} : vector<8x16xf32>, vector<16x1xf32>, vector<8x1xf32> -> vector<8x1xf32>
    %c0_38 = arith.constant 0 : index
    %c0_39 = arith.constant 0 : index
    %70 = vector.load %arg12[%c0_38, %c0_39] : memref<1x1xf32, #tpu.memory_space<vmem>>, vector<1x1xf32>
    %71 = vector.broadcast %70 : vector<1x1xf32> to vector<8x1xf32>
    %72 = arith.addf %69, %71 : vector<8x1xf32>
    %73 = arith.negf %72 : vector<8x1xf32>
    %74 = math.exp %73 : vector<8x1xf32>
    %cst_40 = arith.constant 1.000000e+00 : f32
    %75 = vector.broadcast %cst_40 : f32 to vector<8x1xf32>
    %76 = arith.addf %75, %74 : vector<8x1xf32>
    %77 = arith.divf %75, %76 : vector<8x1xf32>
    %cst_41 = arith.constant dense<0x7F800000> : vector<128xf32>
    %78 = vector.multi_reduction <minimumf>, %47, %cst_41 [0] : vector<8x128xf32> to vector<128xf32>
    %79 = vector.shape_cast %78 : vector<128xf32> to vector<1x128xf32>
    %cst_42 = arith.constant dense<0xFF800000> : vector<128xf32>
    %80 = vector.multi_reduction <maximumf>, %47, %cst_42 [0] : vector<8x128xf32> to vector<128xf32>
    %81 = vector.shape_cast %80 : vector<128xf32> to vector<1x128xf32>
    %82 = vector.broadcast %79 : vector<1x128xf32> to vector<8x128xf32>
    %83 = arith.subf %47, %82 : vector<8x128xf32>
    %84 = arith.subf %81, %79 : vector<1x128xf32>
    %cst_43 = arith.constant 1.000000e-07 : f32
    %85 = vector.broadcast %cst_43 : f32 to vector<1x128xf32>
    %86 = arith.addf %84, %85 : vector<1x128xf32>
    %87 = tpu.reciprocal %86 {approx = true} : vector<1x128xf32> -> vector<1x128xf32>
    %88 = vector.broadcast %87 : vector<1x128xf32> to vector<8x128xf32>
    %89 = arith.mulf %83, %88 : vector<8x128xf32>
    %c0_44 = arith.constant 0 : index
    %c0_45 = arith.constant 0 : index
    %90 = vector.load %arg13[%c0_44, %c0_45] : memref<128x8xf32, #tpu.memory_space<vmem>>, vector<128x8xf32>
    %cst_46 = arith.constant dense<0.000000e+00> : vector<8x8xf32>
    %91 = tpu.matmul %89, %90, %cst_46 {dimension_numbers = #tpu.dot_dimension_numbers<[1], [0], [0], [1], [0, 0, 1, 1], [], []>} : vector<8x128xf32>, vector<128x8xf32>, vector<8x8xf32> -> vector<8x8xf32>
    %c0_47 = arith.constant 0 : index
    %c0_48 = arith.constant 0 : index
    %92 = vector.load %arg14[%c0_47, %c0_48] : memref<1x8xf32, #tpu.memory_space<vmem>>, vector<1x8xf32>
    %93 = vector.broadcast %92 : vector<1x8xf32> to vector<8x8xf32>
    %94 = arith.addf %91, %93 : vector<8x8xf32>
    %cst_49 = arith.constant 0.000000e+00 : f32
    %95 = vector.broadcast %cst_49 : f32 to vector<8x8xf32>
    %96 = arith.maximumf %94, %95 : vector<8x8xf32>
    %c0_50 = arith.constant 0 : index
    %c0_51 = arith.constant 0 : index
    %97 = vector.load %arg15[%c0_50, %c0_51] : memref<8x4xf32, #tpu.memory_space<vmem>>, vector<8x4xf32>
    %cst_52 = arith.constant dense<0.000000e+00> : vector<8x4xf32>
    %98 = tpu.matmul %96, %97, %cst_52 {dimension_numbers = #tpu.dot_dimension_numbers<[1], [0], [0], [1], [0, 0, 1, 1], [], []>} : vector<8x8xf32>, vector<8x4xf32>, vector<8x4xf32> -> vector<8x4xf32>
    %c0_53 = arith.constant 0 : index
    %c0_54 = arith.constant 0 : index
    %99 = vector.load %arg16[%c0_53, %c0_54] : memref<1x4xf32, #tpu.memory_space<vmem>>, vector<1x4xf32>
    %100 = vector.broadcast %99 : vector<1x4xf32> to vector<8x4xf32>
    %101 = arith.addf %98, %100 : vector<8x4xf32>
    %cst_55 = arith.constant dense<0xFF800000> : vector<8xf32>
    %102 = vector.multi_reduction <maximumf>, %101, %cst_55 [1] : vector<8x4xf32> to vector<8xf32>
    %103 = vector.shape_cast %102 : vector<8xf32> to vector<8x1xf32>
    %104 = vector.broadcast %103 : vector<8x1xf32> to vector<8x4xf32>
    %105 = arith.subf %101, %104 : vector<8x4xf32>
    %106 = math.exp %105 : vector<8x4xf32>
    %cst_56 = arith.constant dense<0.000000e+00> : vector<8xf32>
    %107 = vector.multi_reduction <add>, %106, %cst_56 [1] : vector<8x4xf32> to vector<8xf32>
    %108 = vector.shape_cast %107 : vector<8xf32> to vector<8x1xf32>
    %109 = tpu.reciprocal %108 {approx = true} : vector<8x1xf32> -> vector<8x1xf32>
    %110 = vector.broadcast %109 : vector<8x1xf32> to vector<8x4xf32>
    %111 = arith.mulf %106, %110 : vector<8x4xf32>
    %cst_57 = arith.constant dense<0xFF800000> : vector<8xf32>
    %112 = vector.multi_reduction <maximumf>, %111, %cst_57 [1] : vector<8x4xf32> to vector<8xf32>
    %113 = vector.shape_cast %112 : vector<8xf32> to vector<8x1xf32>
    %114 = math.log %108 : vector<8x1xf32>
    %115 = vector.shape_cast %114 : vector<8x1xf32> to vector<1x8x1xf32>
    %cst_58 = arith.constant dense<0.000000e+00> : vector<1xf32>
    %116 = vector.multi_reduction <add>, %115, %cst_58 [1, 2] : vector<1x8x1xf32> to vector<1xf32>
    %117 = vector.shape_cast %116 : vector<1xf32> to vector<1x1x1xf32>
    %118 = vector.extract %117[0, 0, 0] : f32 from vector<1x1x1xf32>
    %cst_59 = arith.constant 8.000000e+00 : f32
    %119 = arith.divf %118, %cst_59 : f32
    %120 = math.log %77 : vector<8x1xf32>
    %cst_60 = arith.constant -1.000000e+02 : f32
    %121 = vector.broadcast %cst_60 : f32 to vector<8x1xf32>
    %122 = arith.maximumf %120, %121 : vector<8x1xf32>
    %cst_61 = arith.constant 0.000000e+00 : f32
    %123 = vector.broadcast %cst_61 : f32 to vector<8x1xf32>
    %124 = arith.subf %123, %122 : vector<8x1xf32>
    %125 = vector.shape_cast %124 : vector<8x1xf32> to vector<1x8x1xf32>
    %cst_62 = arith.constant dense<0.000000e+00> : vector<1xf32>
    %126 = vector.multi_reduction <add>, %125, %cst_62 [1, 2] : vector<1x8x1xf32> to vector<1xf32>
    %127 = vector.shape_cast %126 : vector<1xf32> to vector<1x1x1xf32>
    %128 = vector.extract %127[0, 0, 0] : f32 from vector<1x1x1xf32>
    %cst_63 = arith.constant 8.000000e+00 : f32
    %129 = arith.divf %128, %cst_63 : f32
    %cst_64 = arith.constant 2.000000e-01 : f32
    %130 = arith.mulf %cst_64, %119 : f32
    %cst_65 = arith.constant 4.000000e-01 : f32
    %131 = arith.mulf %cst_65, %129 : f32
    %132 = arith.addf %130, %131 : f32
    %c0_66 = arith.constant 0 : index
    %c0_67 = arith.constant 0 : index
    %133 = memref.load %arg18[%c0_66, %c0_67] : memref<1x1xf32, #tpu.memory_space<smem>>
    memref.store %132, %arg18[%c0_66, %c0_67] : memref<1x1xf32, #tpu.memory_space<smem>>
    %c6_i32_68 = arith.constant 6 : i32
    %134 = vector.broadcast %c6_i32_68 : i32 to vector<8x128xi32>
    %135 = arith.cmpi eq, %12, %134 : vector<8x128xi32>
    %cst_69 = arith.constant 0.000000e+00 : f32
    %136 = vector.shape_cast %113 : vector<8x1xf32> to vector<8x1xf32>
    %137 = vector.broadcast %136 : vector<8x1xf32> to vector<8x128xf32>
    %138 = vector.broadcast %cst_69 : f32 to vector<8x128xf32>
    %139 = arith.select %135, %137, %138 : vector<8x128xi1>, vector<8x128xf32>
    %140 = arith.addf %47, %139 : vector<8x128xf32>
    %c0_70 = arith.constant 0 : index
    %c0_71 = arith.constant 0 : index
    %141 = vector.load %arg17[%c0_70, %c0_71] : memref<8x128xf32, #tpu.memory_space<vmem>>, vector<8x128xf32>
    tpu.vector_store %arg17[%c0_70, %c0_71], %140 {strides = array<i32>} : memref<8x128xf32, #tpu.memory_space<vmem>>, vector<8x128xf32>,
    return
  }
}

</mosaic_0001>

<llo_original>
// kernel: _forward.1
$region0: #{_forward.1}
  #allocation0 [shape = 'u32[]', space=smem, size = 0x4, offset = 0x4, fixed_abs, tag = 'smem constant byte address 0x4 - core index']
  #allocation1 [shape = 'u32[72,128]{1,0:T(1,128)}', space=vmem, size = 0x9000, scoped, tag = 'internal scratch']
  #allocation2 [shape = 'f32[1,1]{1,0:T(1,128)S(1)}', space=vmem, size = 0x200, scoped, tag = 'scoped memory for _forward.1']
  %s0 = inlined_call_operand.vmem [shape: f32[8,16], index: 0, kind: input, shape index: {}]
  %s1 = inlined_call_operand.vmem [shape: f32[16,32], index: 1, kind: input, shape index: {}]
  %s2 = inlined_call_operand.vmem [shape: f32[1,32], index: 2, kind: input, shape index: {}]
  %s3 = inlined_call_operand.vmem [shape: f32[32,128], index: 3, kind: input, shape index: {}]
  %s4 = inlined_call_operand.vmem [shape: f32[1,128], index: 4, kind: input, shape index: {}]
  %s5 = inlined_call_operand.vmem [shape: f32[128,32], index: 5, kind: input, shape index: {}]
  %s6 = inlined_call_operand.vmem [shape: f32[1,32], index: 6, kind: input, shape index: {}]
  %s7 = inlined_call_operand.vmem [shape: f32[32,16], index: 7, kind: input, shape index: {}]
  %s8 = inlined_call_operand.vmem [shape: f32[1,16], index: 8, kind: input, shape index: {}]
  %s9 = inlined_call_operand.vmem [shape: f32[16,16], index: 9, kind: input, shape index: {}]
  %s10 = inlined_call_operand.vmem [shape: f32[1,16], index: 10, kind: input, shape index: {}]
  %s11 = inlined_call_operand.vmem [shape: f32[16,1], index: 11, kind: input, shape index: {}]
  %s12 = inlined_call_operand.<no memory space> [shape: f32[1,1], index: 12, kind: input, shape index: {}]
  %s13 = inlined_call_operand.vmem [shape: f32[128,8], index: 13, kind: input, shape index: {}]
  %s14 = inlined_call_operand.vmem [shape: f32[1,8], index: 14, kind: input, shape index: {}]
  %s15 = inlined_call_operand.vmem [shape: f32[8,4], index: 15, kind: input, shape index: {}]
  %s16 = inlined_call_operand.vmem [shape: f32[1,4], index: 16, kind: input, shape index: {}]
  %s17 = inlined_call_operand.vmem [shape: f32[8,128], index: 17, kind: output, shape index: {0}]
  %s18 = inlined_call_operand.hbm [shape: f32[1,1], index: 18, kind: output, shape index: {1}]
  %19 = xla_tuple %s17, %s18
  %s20 = sld [smem:[#allocation0]]
  $region86: #{_forward.1} parent=0
    _
  %s22 = ssub.s32 1, %s20
  %s23 = scalar_select 0, %s22, %s20
  %v24 = vstv %s12
  %25 = vst [vmem:[#allocation2] sm:$0x1] %v24
  $region1: #{_forward.1} parent=0
    #allocation3 [shape = 'u8[512]{0}', space=smem, size = 0x200, scoped, tag = 'output window, operand 1, single buffered']
    #allocation4 [shape = 's32[1]{0}', space=sflag, size = 0x4, scoped, tag = 'scoped memory for _forward.1']
    %26 = vsyncpa [#allocation4], 0
    // Predicated region
    $region2: #{_forward.1} parent=1 // pred_check
      _
    $region3: #{_forward.1} parent=1 // pred_check_branch
      %28 = sbr.rel (0) target = $region5
    $region4: #{_forward.1} parent=1 // pred_region
      _
    $region5: #{_forward.1} parent=1 // pred_fallthru
      _
    // Predicated region
    $region6: #{_forward.1} parent=1 // pred_check
      _
    $region7: #{_forward.1} parent=1 // pred_check_branch
      %30 = sbr.rel (0) target = $region9
    $region8: #{_forward.1} parent=1 // pred_region
      _
    $region9: #{_forward.1} parent=1 // pred_fallthru
      _
    // Predicated region
    $region10: #{_forward.1} parent=1 // pred_check
      _
    $region11: #{_forward.1} parent=1 // pred_check_branch
      %32 = sbr.rel (0) target = $region13
    $region12: #{_forward.1} parent=1 // pred_region
      _
    $region13: #{_forward.1} parent=1 // pred_fallthru
      _
    // Predicated region
    $region14: #{_forward.1} parent=1 // pred_check
      _
    $region15: #{_forward.1} parent=1 // pred_check_branch
      %34 = sbr.rel (0) target = $region17
    $region16: #{_forward.1} parent=1 // pred_region
      _
    $region17: #{_forward.1} parent=1 // pred_fallthru
      _
    // Predicated region
    $region18: #{_forward.1} parent=1 // pred_check
      _
    $region19: #{_forward.1} parent=1 // pred_check_branch
      %36 = sbr.rel (0) target = $region21
    $region20: #{_forward.1} parent=1 // pred_region
      _
    $region21: #{_forward.1} parent=1 // pred_fallthru
      _
    // Predicated region
    $region22: #{_forward.1} parent=1 // pred_check
      _
    $region23: #{_forward.1} parent=1 // pred_check_branch
      %38 = sbr.rel (0) target = $region25
    $region24: #{_forward.1} parent=1 // pred_region
      _
    $region25: #{_forward.1} parent=1 // pred_fallthru
      _
    // Predicated region
    $region26: #{_forward.1} parent=1 // pred_check
      _
    $region27: #{_forward.1} parent=1 // pred_check_branch
      %40 = sbr.rel (0) target = $region29
    $region28: #{_forward.1} parent=1 // pred_region
      _
    $region29: #{_forward.1} parent=1 // pred_fallthru
      _
    // Predicated region
    $region30: #{_forward.1} parent=1 // pred_check
      _
    $region31: #{_forward.1} parent=1 // pred_check_branch
      %42 = sbr.rel (0) target = $region33
    $region32: #{_forward.1} parent=1 // pred_region
      _
    $region33: #{_forward.1} parent=1 // pred_fallthru
      _
    // Predicated region
    $region34: #{_forward.1} parent=1 // pred_check
      _
    $region35: #{_forward.1} parent=1 // pred_check_branch
      %44 = sbr.rel (0) target = $region37
    $region36: #{_forward.1} parent=1 // pred_region
      _
    $region37: #{_forward.1} parent=1 // pred_fallthru
      _
    // Predicated region
    $region38: #{_forward.1} parent=1 // pred_check
      _
    $region39: #{_forward.1} parent=1 // pred_check_branch
      %46 = sbr.rel (0) target = $region41
    $region40: #{_forward.1} parent=1 // pred_region
      _
    $region41: #{_forward.1} parent=1 // pred_fallthru
      _
    // Predicated region
    $region42: #{_forward.1} parent=1 // pred_check
      _
    $region43: #{_forward.1} parent=1 // pred_check_branch
      %48 = sbr.rel (0) target = $region45
    $region44: #{_forward.1} parent=1 // pred_region
      _
    $region45: #{_forward.1} parent=1 // pred_fallthru
      _
    // Predicated region
    $region46: #{_forward.1} parent=1 // pred_check
      _
    $region47: #{_forward.1} parent=1 // pred_check_branch
      %50 = sbr.rel (0) target = $region49
    $region48: #{_forward.1} parent=1 // pred_region
      _
    $region49: #{_forward.1} parent=1 // pred_fallthru
      _
    // Predicated region
    $region50: #{_forward.1} parent=1 // pred_check
      _
    $region51: #{_forward.1} parent=1 // pred_check_branch
      %52 = sbr.rel (0) target = $region53
    $region52: #{_forward.1} parent=1 // pred_region
      _
    $region53: #{_forward.1} parent=1 // pred_fallthru
      _
    // Predicated region
    $region54: #{_forward.1} parent=1 // pred_check
      _
    $region55: #{_forward.1} parent=1 // pred_check_branch
      %54 = sbr.rel (0) target = $region57
    $region56: #{_forward.1} parent=1 // pred_region
      _
    $region57: #{_forward.1} parent=1 // pred_fallthru
      _
    // Predicated region
    $region58: #{_forward.1} parent=1 // pred_check
      _
    $region59: #{_forward.1} parent=1 // pred_check_branch
      %56 = sbr.rel (0) target = $region61
    $region60: #{_forward.1} parent=1 // pred_region
      _
    $region61: #{_forward.1} parent=1 // pred_fallthru
      _
    // Predicated region
    $region62: #{_forward.1} parent=1 // pred_check
      _
    $region63: #{_forward.1} parent=1 // pred_check_branch
      %58 = sbr.rel (0) target = $region65
    $region64: #{_forward.1} parent=1 // pred_region
      _
    $region65: #{_forward.1} parent=1 // pred_fallthru
      _
    // Predicated region
    $region66: #{_forward.1} parent=1 // pred_check
      _
    $region67: #{_forward.1} parent=1 // pred_check_branch
      %60 = sbr.rel (0) target = $region69
    $region68: #{_forward.1} parent=1 // pred_region
      _
    $region69: #{_forward.1} parent=1 // pred_fallthru
      _
    %v61 = vld [vmem:[%s0] sm:$0xff]
    %v62 = vld [vmem:[%s1] sm:$0xff]
    %v63 = vld [vmem:[%s1 + $0x8] sm:$0xff]
    %v64 = vld [vmem:[%s2] sm:$0x1]
    %v66 = vperm.slane %v64, 0
    %vm68 = vcmask 130048
    %v70 = vsel %vm68, %v61, 0
    %72 = vmatpush.msra.mxu0 0.0
    %73 = vmatpush.msra.mxu0 0.0
    %74 = vmatpush.msra.mxu0 0.0
    %75 = vmatpush.msra.mxu0 0.0
    %76 = vmatpush.msra.mxu0 0.0
    %77 = vmatpush.msra.mxu0 0.0
    %78 = vmatpush.msra.mxu0 0.0
    %79 = vmatpush.msra.mxu0 0.0
    %80 = vmatpush.msra.mxu0 0.0
    %81 = vmatpush.msra.mxu0 0.0
    %82 = vmatpush.msra.mxu0 0.0
    %83 = vmatpush.msra.mxu0 0.0
    %84 = vmatpush.msra.mxu0 0.0
    %85 = vmatpush.msra.mxu0 0.0
    %86 = vmatpush.msra.mxu0 %v63
    %87 = vmatpush.msra.mxu0 %v62
    %88 = vmatmul.f32.gmra.mxu0 %v70
    %v89 = vpop.f32.mrf.mxu0
    %v90 = vadd.f32 %v66, %v89
    %91 = vdwg.mxu0
    %v92 = vtanh.pop %v90
    %v93 = vld [vmem:[%s3] sm:$0xff]
    %v94 = vld [vmem:[%s3 + $0x8] sm:$0xff]
    %v95 = vld [vmem:[%s3 + $0x10] sm:$0xff]
    %v96 = vld [vmem:[%s3 + $0x18] sm:$0xff]
    %v97 = vld [vmem:[%s4] sm:$0x1]
    %v99 = vperm.slane %v97, 0
    %vm101 = vcmask 261120
    %v103 = vsel %vm101, %v92, 0
    %105 = vmatpush.msra.mxu0 0.0
    %106 = vmatpush.msra.mxu0 0.0
    %107 = vmatpush.msra.mxu0 0.0
    %108 = vmatpush.msra.mxu0 0.0
    %109 = vmatpush.msra.mxu0 0.0
    %110 = vmatpush.msra.mxu0 0.0
    %111 = vmatpush.msra.mxu0 0.0
    %112 = vmatpush.msra.mxu0 0.0
    %113 = vmatpush.msra.mxu0 0.0
    %114 = vmatpush.msra.mxu0 0.0
    %115 = vmatpush.msra.mxu0 0.0
    %116 = vmatpush.msra.mxu0 0.0
    %117 = vmatpush.msra.mxu0 %v96
    %118 = vmatpush.msra.mxu0 %v95
    %119 = vmatpush.msra.mxu0 %v94
    %120 = vmatpush.msra.mxu0 %v93
    %121 = vmatmul.f32.gmra.mxu0 %v103
    %v122 = vpop.f32.mrf.mxu0
    %v123 = vadd.f32 %v99, %v122
    %124 = vdwg.mxu0
    %v125 = vlaneseq
    %v126 = vand.u32 %v125, 127
    %vm127 = vcmp.lt.s32.totalorder %v126, 3
    %vm128 = vcmp.ge.s32.totalorder %v126, 3
    %vm129 = vcmp.lt.s32.totalorder %v126, 5
    %vm130 = vmand %vm128, %vm129
    %vm131 = vcmp.ge.s32.totalorder %v126, 5
    %vm132 = vcmp.lt.s32.totalorder %v126, 6
    %vm133 = vmand %vm131, %vm132
    %v134 = vsel %vm127, %v123, -1e+30
    %135 = vmax.xlane.f32.xlu0 %v134
    %v136 = vpop.xlane.xlu0 %135
    %v137 = vsub.f32 %v123, %v136
    %v138 = vmul.f32 %v137, 1.442695
    %v139 = vpow.pop %v138
    %v140 = vsel %vm127, %v139, 0.0
    %141 = vadd.xlane.f32.xlu0 %v140
    %v142 = vpop.xlane.xlu0 %141
    %v143 = vrcp.pop %v142
    %v144 = vmul.f32 %v140, %v143
    %v145 = vxor.u32 %v123, 2147483648
    %v146 = vmul.f32 %v145, 1.442695
    %v147 = vpow.pop %v146
    %v148 = vadd.f32 %v147, 1.0
    %v149 = vrcp.pop %v148
    %v150 = vmul.f32 %v148, %v149
    %v151 = vsub.f32 1.0, %v150
    %v152 = vmul.f32 %v149, %v151
    %v153 = vadd.f32 %v149, %v152
    %vm154 = vweird.f32 %v148
    %vm155 = vweird.f32 %v149
    %vm156 = vmor %vm154, %vm155
    %v157 = vsel %vm156, %v149, %v153
    %v158 = vand.u32 2147483647, %v148
    %vm159 = vcmp.eq.f32.partialorder %v158, 8.507059e+37
    %v160 = vand.u32 %v148, 2147483648
    %v161 = vor.u32 1.1754944e-38, %v160
    %v162 = vsel %vm159, %v161, %v157
    %v163 = vmul.f32 1.0, %v162
    %v164 = vsel %vm133, %v163, 0.0
    %v165 = vsel %vm130, %v123, %v164
    %v166 = vsel %vm127, %v144, %v165
    %v167 = vld [vmem:[%s5] sm:$0xff]
    %v168 = vld [vmem:[%s5 + $0x8] sm:$0xff]
    %v169 = vld [vmem:[%s5 + $0x10] sm:$0xff]
    %v170 = vld [vmem:[%s5 + $0x18] sm:$0xff]
    %v171 = vld [vmem:[%s5 + $0x20] sm:$0xff]
    %v172 = vld [vmem:[%s5 + $0x28] sm:$0xff]
    %v173 = vld [vmem:[%s5 + $0x30] sm:$0xff]
    %v174 = vld [vmem:[%s5 + $0x38] sm:$0xff]
    %v175 = vld [vmem:[%s5 + $0x40] sm:$0xff]
    %v176 = vld [vmem:[%s5 + $0x48] sm:$0xff]
    %v177 = vld [vmem:[%s5 + $0x50] sm:$0xff]
    %v178 = vld [vmem:[%s5 + $0x58] sm:$0xff]
    %v179 = vld [vmem:[%s5 + $0x60] sm:$0xff]
    %v180 = vld [vmem:[%s5 + $0x68] sm:$0xff]
    %v181 = vld [vmem:[%s5 + $0x70] sm:$0xff]
    %v182 = vld [vmem:[%s5 + $0x78] sm:$0xff]
    %v183 = vld [vmem:[%s6] sm:$0x1]
    %v185 = vperm.slane %v183, 0
    %187 = vmatpush.msra.mxu0 %v182
    %188 = vmatpush.msra.mxu0 %v181
    %189 = vmatpush.msra.mxu0 %v180
    %190 = vmatpush.msra.mxu0 %v179
    %191 = vmatpush.msra.mxu0 %v178
    %192 = vmatpush.msra.mxu0 %v177
    %193 = vmatpush.msra.mxu0 %v176
    %194 = vmatpush.msra.mxu0 %v175
    %195 = vmatpush.msra.mxu0 %v174
    %196 = vmatpush.msra.mxu0 %v173
    %197 = vmatpush.msra.mxu0 %v172
    %198 = vmatpush.msra.mxu0 %v171
    %199 = vmatpush.msra.mxu0 %v170
    %200 = vmatpush.msra.mxu0 %v169
    %201 = vmatpush.msra.mxu0 %v168
    %202 = vmatpush.msra.mxu0 %v167
    %203 = vmatmul.f32.gmra.mxu0 %v166
    %v204 = vpop.f32.mrf.mxu0
    %v205 = vadd.f32 %v185, %v204
    %206 = vdwg.mxu0
    %v207 = vmax.f32 %v205, 0.0
    %v208 = vld [vmem:[%s7] sm:$0xff]
    %v209 = vld [vmem:[%s7 + $0x8] sm:$0xff]
    %v210 = vld [vmem:[%s7 + $0x10] sm:$0xff]
    %v211 = vld [vmem:[%s7 + $0x18] sm:$0xff]
    %v212 = vld [vmem:[%s8] sm:$0x1]
    %v214 = vperm.slane %v212, 0
    %v217 = vsel %vm101, %v207, 0
    %219 = vmatpush.msra.mxu0 0.0
    %220 = vmatpush.msra.mxu0 0.0
    %221 = vmatpush.msra.mxu0 0.0
    %222 = vmatpush.msra.mxu0 0.0
    %223 = vmatpush.msra.mxu0 0.0
    %224 = vmatpush.msra.mxu0 0.0
    %225 = vmatpush.msra.mxu0 0.0
    %226 = vmatpush.msra.mxu0 0.0
    %227 = vmatpush.msra.mxu0 0.0
    %228 = vmatpush.msra.mxu0 0.0
    %229 = vmatpush.msra.mxu0 0.0
    %230 = vmatpush.msra.mxu0 0.0
    %231 = vmatpush.msra.mxu0 %v211
    %232 = vmatpush.msra.mxu0 %v210
    %233 = vmatpush.msra.mxu0 %v209
    %234 = vmatpush.msra.mxu0 %v208
    %235 = vmatmul.f32.gmra.mxu0 %v217
    %v236 = vpop.f32.mrf.mxu0
    %v237 = vadd.f32 %v214, %v236
    %238 = vdwg.mxu0
    %v239 = vtanh.pop %v237
    %v240 = vld [vmem:[%s9] sm:$0xff]
    %v241 = vld [vmem:[%s9 + $0x8] sm:$0xff]
    %v242 = vld [vmem:[%s10] sm:$0x1]
    %v244 = vperm.slane %v242, 0
    %v247 = vsel %vm68, %v239, 0
    %249 = vmatpush.msra.mxu0 0.0
    %250 = vmatpush.msra.mxu0 0.0
    %251 = vmatpush.msra.mxu0 0.0
    %252 = vmatpush.msra.mxu0 0.0
    %253 = vmatpush.msra.mxu0 0.0
    %254 = vmatpush.msra.mxu0 0.0
    %255 = vmatpush.msra.mxu0 0.0
    %256 = vmatpush.msra.mxu0 0.0
    %257 = vmatpush.msra.mxu0 0.0
    %258 = vmatpush.msra.mxu0 0.0
    %259 = vmatpush.msra.mxu0 0.0
    %260 = vmatpush.msra.mxu0 0.0
    %261 = vmatpush.msra.mxu0 0.0
    %262 = vmatpush.msra.mxu0 0.0
    %263 = vmatpush.msra.mxu0 %v241
    %264 = vmatpush.msra.mxu0 %v240
    %265 = vmatmul.f32.gmra.mxu0 %v247
    %v266 = vpop.f32.mrf.mxu0
    %v267 = vadd.f32 %v244, %v266
    %268 = vdwg.mxu0
    %v269 = vmax.f32 %v267, 0.0
    %v270 = vld [vmem:[%s11] sm:$0xff]
    %v271 = vld [vmem:[%s11 + $0x8] sm:$0xff]
    %v272 = vld [vmem:[#allocation2] sm:$0x1]
    %v274 = vperm.slane %v272, 0
    %v277 = vsel %vm68, %v269, 0
    %279 = vmatpush.msra.mxu0 0.0
    %280 = vmatpush.msra.mxu0 0.0
    %281 = vmatpush.msra.mxu0 0.0
    %282 = vmatpush.msra.mxu0 0.0
    %283 = vmatpush.msra.mxu0 0.0
    %284 = vmatpush.msra.mxu0 0.0
    %285 = vmatpush.msra.mxu0 0.0
    %286 = vmatpush.msra.mxu0 0.0
    %287 = vmatpush.msra.mxu0 0.0
    %288 = vmatpush.msra.mxu0 0.0
    %289 = vmatpush.msra.mxu0 0.0
    %290 = vmatpush.msra.mxu0 0.0
    %291 = vmatpush.msra.mxu0 0.0
    %292 = vmatpush.msra.mxu0 0.0
    %293 = vmatpush.msra.mxu0 %v271
    %294 = vmatpush.msra.mxu0 %v270
    %295 = vmatmul.f32.gmra.mxu0 %v277
    %v296 = vpop.f32.mrf.mxu0
    %v297 = vadd.f32 %v274, %v296
    %298 = vdwg.mxu0
    %v299 = vxor.u32 %v297, 2147483648
    %v300 = vmul.f32 %v299, 1.442695
    %v301 = vpow.pop %v300
    %v302 = vadd.f32 %v301, 1.0
    %v303 = vrcp.pop %v302
    %v304 = vmul.f32 %v302, %v303
    %v305 = vsub.f32 1.0, %v304
    %v306 = vmul.f32 %v303, %v305
    %v307 = vadd.f32 %v303, %v306
    %vm308 = vweird.f32 %v302
    %vm309 = vweird.f32 %v303
    %vm310 = vmor %vm308, %vm309
    %v311 = vsel %vm310, %v303, %v307
    %v312 = vand.u32 2147483647, %v302
    %vm313 = vcmp.eq.f32.partialorder %v312, 8.507059e+37
    %v314 = vand.u32 %v302, 2147483648
    %v315 = vor.u32 1.1754944e-38, %v314
    %v316 = vsel %vm313, %v315, %v311
    %v317 = vmul.f32 1.0, %v316
    %v318 = vrot.slane %v166, 4
    %v319 = vmin.f32 %v166, %v318
    %v320 = vrot.slane %v319, 2
    %v321 = vmin.f32 %v319, %v320
    %v322 = vrot.slane %v321, 1
    %v323 = vmin.f32 %v321, %v322
    %v324 = vrot.slane %v166, 4
    %v325 = vmax.f32 %v166, %v324
    %v326 = vrot.slane %v325, 2
    %v327 = vmax.f32 %v325, %v326
    %v328 = vrot.slane %v327, 1
    %v329 = vmax.f32 %v327, %v328
    %v330 = vsub.f32 %v166, %v323
    %v331 = vsub.f32 %v329, %v323
    %v332 = vadd.f32 %v331, 1e-07
    %v333 = vrcp.pop %v332
    %v334 = vmul.f32 %v330, %v333
    %v335 = vld [vmem:[%s13] sm:$0xff]
    %v336 = vld [vmem:[%s13 + $0x8] sm:$0xff]
    %v337 = vld [vmem:[%s13 + $0x10] sm:$0xff]
    %v338 = vld [vmem:[%s13 + $0x18] sm:$0xff]
    %v339 = vld [vmem:[%s13 + $0x20] sm:$0xff]
    %v340 = vld [vmem:[%s13 + $0x28] sm:$0xff]
    %v341 = vld [vmem:[%s13 + $0x30] sm:$0xff]
    %v342 = vld [vmem:[%s13 + $0x38] sm:$0xff]
    %v343 = vld [vmem:[%s13 + $0x40] sm:$0xff]
    %v344 = vld [vmem:[%s13 + $0x48] sm:$0xff]
    %v345 = vld [vmem:[%s13 + $0x50] sm:$0xff]
    %v346 = vld [vmem:[%s13 + $0x58] sm:$0xff]
    %v347 = vld [vmem:[%s13 + $0x60] sm:$0xff]
    %v348 = vld [vmem:[%s13 + $0x68] sm:$0xff]
    %v349 = vld [vmem:[%s13 + $0x70] sm:$0xff]
    %v350 = vld [vmem:[%s13 + $0x78] sm:$0xff]
    %v351 = vld [vmem:[%s14] sm:$0x1]
    %v353 = vperm.slane %v351, 0
    %355 = vmatpush.msra.mxu0 %v350
    %356 = vmatpush.msra.mxu0 %v349
    %357 = vmatpush.msra.mxu0 %v348
    %358 = vmatpush.msra.mxu0 %v347
    %359 = vmatpush.msra.mxu0 %v346
    %360 = vmatpush.msra.mxu0 %v345
    %361 = vmatpush.msra.mxu0 %v344
    %362 = vmatpush.msra.mxu0 %v343
    %363 = vmatpush.msra.mxu0 %v342
    %364 = vmatpush.msra.mxu0 %v341
    %365 = vmatpush.msra.mxu0 %v340
    %366 = vmatpush.msra.mxu0 %v339
    %367 = vmatpush.msra.mxu0 %v338
    %368 = vmatpush.msra.mxu0 %v337
    %369 = vmatpush.msra.mxu0 %v336
    %370 = vmatpush.msra.mxu0 %v335
    %371 = vmatmul.f32.gmra.mxu0 %v334
    %v372 = vpop.f32.mrf.mxu0
    %v373 = vadd.f32 %v353, %v372
    %374 = vdwg.mxu0
    %v375 = vmax.f32 %v373, 0.0
    %v376 = vld [vmem:[%s15] sm:$0xff]
    %v377 = vld [vmem:[%s16] sm:$0x1]
    %v379 = vperm.slane %v377, 0
    %vm381 = vcmask 64512
    %v383 = vsel %vm381, %v375, 0
    %385 = vmatpush.msra.mxu0 0.0
    %386 = vmatpush.msra.mxu0 0.0
    %387 = vmatpush.msra.mxu0 0.0
    %388 = vmatpush.msra.mxu0 0.0
    %389 = vmatpush.msra.mxu0 0.0
    %390 = vmatpush.msra.mxu0 0.0
    %391 = vmatpush.msra.mxu0 0.0
    %392 = vmatpush.msra.mxu0 0.0
    %393 = vmatpush.msra.mxu0 0.0
    %394 = vmatpush.msra.mxu0 0.0
    %395 = vmatpush.msra.mxu0 0.0
    %396 = vmatpush.msra.mxu0 0.0
    %397 = vmatpush.msra.mxu0 0.0
    %398 = vmatpush.msra.mxu0 0.0
    %399 = vmatpush.msra.mxu0 0.0
    %400 = vmatpush.msra.mxu0 %v376
    %401 = vmatmul.f32.gmra.mxu0 %v383
    %v402 = vpop.f32.mrf.mxu0
    %v403 = vadd.f32 %v379, %v402
    %404 = vdwg.mxu0
    %vm405 = vcmask 31744
    %v406 = vsel %vm405, %v403, -inf
    %407 = vmax.xlane.f32.xlu0 %v406
    %v408 = vpop.xlane.xlu0 %407
    %v409 = vsub.f32 %v403, %v408
    %v410 = vmul.f32 %v409, 1.442695
    %v411 = vpow.pop %v410
    %v412 = vsel %vm405, %v411, 0.0
    %413 = vadd.xlane.f32.xlu0 %v412
    %v414 = vpop.xlane.xlu0 %413
    %v415 = vrcp.pop %v414
    %v416 = vmul.f32 %v411, %v415
    %v417 = vsel %vm405, %v416, -inf
    %418 = vmax.xlane.f32.xlu0 %v417
    %v419 = vpop.xlane.xlu0 %418
    %v420 = vlog2.pop %v414
    %v421 = vmul.f32 %v420, 0.6931472
    %vm422 = vcmask 7168
    %v423 = vsel %vm422, %v421, 0.0
    %424 = vadd.xlane.f32.xlu0 %v423
    %v425 = vpop.xlane.xlu0 %424
    %v426 = vrot.slane %v425, 4
    %v427 = vadd.f32 %v425, %v426
    %v428 = vrot.slane %v427, 2
    %v429 = vadd.f32 %v427, %v428
    %v430 = vrot.slane %v429, 1
    %v431 = vadd.f32 %v429, %v430
    %s432 = vtos %v431
    %v433 = vrcp.pop 8.0
    %v434 = vmul.f32 8.0, %v433
    %v435 = vsub.f32 1.0, %v434
    %v436 = vmul.f32 %v433, %v435
    %v437 = vadd.f32 %v433, %v436
    %vm438 = vweird.f32 %v433
    %v439 = vsel %vm438, %v433, %v437
    %s440 = vtos %v439
    %s441 = smul.f32 %s432, %s440
    %v442 = vlog2.pop %v317
    %v443 = vmul.f32 %v442, 0.6931472
    %v444 = vmax.f32 %v443, -100.0
    %v445 = vsub.f32 0.0, %v444
    %v446 = vsel %vm422, %v445, 0.0
    %447 = vadd.xlane.f32.xlu0 %v446
    %v448 = vpop.xlane.xlu0 %447
    %v449 = vrot.slane %v448, 4
    %v450 = vadd.f32 %v448, %v449
    %v451 = vrot.slane %v450, 2
    %v452 = vadd.f32 %v450, %v451
    %v453 = vrot.slane %v452, 1
    %v454 = vadd.f32 %v452, %v453
    %s455 = vtos %v454
    %v456 = vrcp.pop 8.0
    %v457 = vmul.f32 8.0, %v456
    %v458 = vsub.f32 1.0, %v457
    %v459 = vmul.f32 %v456, %v458
    %v460 = vadd.f32 %v456, %v459
    %vm461 = vweird.f32 %v456
    %v462 = vsel %vm461, %v456, %v460
    %s463 = vtos %v462
    %s464 = smul.f32 %s455, %s463
    %s465 = smul.f32 %s441, 0.2
    %s466 = smul.f32 %s464, 0.4
    %s467 = sadd.f32 %s465, %s466
    %s468 = scalar_lea.smem [#allocation3], 0
    %469 = sst [smem:[%s468]] %s467
    %vm470 = vcmp.eq.s32.totalorder %v126, 6
    %v471 = vsel %vm470, %v419, 0.0
    %v472 = vadd.f32 %v166, %v471
    %473 = vst [vmem:[%s17] sm:$0xff] %v472
    // Predicated region
    $region70: #{_forward.1} parent=1 // pred_check
      _
    $region71: #{_forward.1} parent=1 // pred_check_branch
      %475 = sbr.rel (0) target = $region73
    $region72: #{_forward.1} parent=1 // pred_region
      _
    $region73: #{_forward.1} parent=1 // pred_fallthru
      _
    // Predicated region
    $region74: #{_forward.1} parent=1 // pred_check
      _
    $region75: #{_forward.1} parent=1 // pred_check_branch
      %477 = sbr.rel (0) target = $region77
    $region76: #{_forward.1} parent=1 // pred_region
      %479 = vsyncadd [#allocation4], 0
      %s481 = sshll.u32 %s18, 4
      %s482 = int_to_ptr.hbm [resolvable:$true] %s481
      %484 = dma.smem_to_hbm [#allocation3], 16, %s482, [#allocation4]
    $region77: #{_forward.1} parent=1 // pred_fallthru
      _
    // Predicated region
    $region78: #{_forward.1} parent=1 // pred_check
      _
    $region79: #{_forward.1} parent=1 // pred_check_branch
      %486 = sbr.rel (0) target = $region81
    $region80: #{_forward.1} parent=1 // pred_region
      _
    $region81: #{_forward.1} parent=1 // pred_fallthru
      _
    // Predicated region
    $region82: #{_forward.1} parent=1 // pred_check
      _
    $region83: #{_forward.1} parent=1 // pred_check_branch
      %488 = sbr.rel (0) target = $region85
    $region84: #{_forward.1} parent=1 // pred_region
      %490 = dma.done [#allocation4], 16
    $region85: #{_forward.1} parent=1 // pred_fallthru
      _
    %491 = sfence
    %492 = vsyncpa [#allocation4], 1

</llo_original>
